<compile_context>
chip_gen: v6e
topology: v6e:2x2x1
jax: 0.10.0
libtpu: 0.0.40
codegen_flags: <defaults>
</compile_context>

<pallas_src>
import functools
from math import sqrt, ceil

import jax
import jax.numpy as jnp
from jax.experimental import pallas as pl
from jax.experimental.pallas import tpu as pltpu


def _round_up(v: int, m: int) -> int:
    return (v + m - 1) // m * m


def _conv2x_kernel(x_ref, w1_ref, w2_ref, mask_ref, o_ref, *, W):
    """Two 3x3 same-padding convs (ReLU only after the 2nd), biases folded.

    x_ref   : (Cin_p,  L)      channels on sublanes, batched spatial on lanes;
                               channel index Cin is a constant-ones channel.
    w1_ref  : (Cmid_p, 9*Cin_p)  conv1 weights, columns ordered (kh, kw, ci);
                                 bias folded into centre-tap ones-channel col.
    w2_ref  : (Cout_p, 9*Cmid_p) conv2 weights, same ordering / bias folding.
    mask_ref: (8, L)  per-non-centre-tap border-validity masks (0.0 / 1.0),
                      computed from lane % HW so images never leak into each
                      other when several images share the lane axis.
    o_ref   : (Cout_p, L)
    """
    L = x_ref.shape[-1]
    x = x_ref[...]                       # (Cin_p, L)
    mask = mask_ref[...]                 # (8, L)

    def im2col(z):
        # z: (C_p, L) -> (9*C_p, L); row block t = tap (kh*3+kw) holds the
        # spatially shifted (and border-masked) copy of z for that tap.
        taps = []
        mi = 0
        for kh in range(3):
            for kw in range(3):
                dy, dx = kh - 1, kw - 1
                off = dy * W + dx                 # source lane = lane + off
                if off == 0:
                    taps.append(z)                # centre tap: always valid
                else:
                    sh = pltpu.roll(z, (-off) % L, axis=1)
                    taps.append(sh * mask[mi:mi + 1])
                    mi += 1
        return jnp.concatenate(taps, axis=0)

    mid = jnp.dot(w1_ref[...], im2col(x),         # (Cmid_p, L), bias folded
                  preferred_element_type=jnp.float32)
    out = jnp.dot(w2_ref[...], im2col(mid),       # (Cout_p, L), bias folded
                  preferred_element_type=jnp.float32)
    o_ref[...] = jnp.maximum(out, 0.0)            # lane-dense store


def keep_size_conv2d_layer_x2_ss(x_nchw, w1, b1, w2, b2):
    """Pallas implementation of KeepSizeConv2dLayerx2SS.forward.

    x_nchw: (N, Cin, H, W) float32
    w1: (Cmid, Cin, 3, 3), b1: (Cmid,)   -- PyTorch OIHW layout
    w2: (Cout, Cmid, 3, 3), b2: (Cout,)
    returns (N, Cout, H, W) float32
    """
    N, Cin, H, W = x_nchw.shape
    Cmid, Cout = w1.shape[0], w2.shape[0]
    HW = H * W

    # One spare padded input/mid channel is reserved for the constant-ones
    # row used to fold the biases into the matmuls.
    Cin_p = _round_up(Cin + 1, 8)
    Cmid_p = _round_up(Cmid + 1, 8)
    Cout_p = _round_up(Cout, 8)

    # Grid: >=2 steps when N>=2 (v7x has 2 TensorCores), multiple images per
    # step once N > 2 (amortizes the ~0.35us/step overhead on v5e/v6e), and
    # lanes/step capped so the (9*C_p, L) im2col stays well under 64 vregs.
    # TODO(synk): if HW grows well beyond ~512 lanes the whole-image-in-vregs
    # im2col no longer fits the vreg file; add a lane-axis tile loop with
    # halo handling (or a VMEM-scratch im2col) before scaling H, W.
    MAX_LANES_PER_STEP = 512
    imgs_per_step = max(1, min((N + 1) // 2, max(MAX_LANES_PER_STEP // HW, 1)))
    N_pad = _round_up(N, imgs_per_step)
    G = N_pad // imgs_per_step
    L_blk = imgs_per_step * HW

    # --- inputs: NCHW -> (Cin_p, N_pad*HW), channel Cin = constant ones ----
    x = x_nchw.astype(jnp.float32).reshape(N, Cin, HW)
    xp = jnp.concatenate(
        [x,
         jnp.ones((N, 1, HW), jnp.float32),
         jnp.zeros((N, Cin_p - Cin - 1, HW), jnp.float32)], axis=1)
    if N_pad > N:
        xp = jnp.pad(xp, ((0, N_pad - N), (0, 0), (0, 0)))
    xk = jnp.transpose(xp, (1, 0, 2)).reshape(Cin_p, N_pad * HW)

    # --- weights: OIHW -> (O_p, 9*I_p), column = (kh*3+kw)*I_p + ci, with the
    # bias folded into the centre-tap column of the ones channel/row. --------
    def prep_w(w, b, o_p, i_p, ones_in_idx, ones_out_idx):
        o = w.shape[0]
        wt = jnp.transpose(w.astype(jnp.float32), (0, 2, 3, 1))      # (O,3,3,I)
        wt = jnp.pad(wt, ((0, o_p - o), (0, 0), (0, 0), (0, i_p - w.shape[1])))
        wt = wt.at[:o, 1, 1, ones_in_idx].set(b.astype(jnp.float32))
        if ones_out_idx is not None:
            # make padded output row `ones_out_idx` produce a constant 1
            wt = wt.at[ones_out_idx, 1, 1, ones_in_idx].set(1.0)
        return wt.reshape(o_p, 9 * i_p)

    w1k = prep_w(w1, b1, Cmid_p, Cin_p, ones_in_idx=Cin, ones_out_idx=Cmid)
    w2k = prep_w(w2, b2, Cout_p, Cmid_p, ones_in_idx=Cmid, ones_out_idx=None)

    # --- precomputed border masks, shared by all grid steps (lane % HW) -----
    lane = jnp.arange(L_blk)
    p = lane % HW
    yy = p // W
    xx = p % W
    rows = []
    for kh in range(3):
        for kw in range(3):
            dy, dx = kh - 1, kw - 1
            if dy == 0 and dx == 0:
                continue
            valid = ((yy + dy >= 0) & (yy + dy < H) &
                     (xx + dx >= 0) & (xx + dx < W))
            rows.append(valid.astype(jnp.float32))
    maskk = jnp.stack(rows, axis=0)                       # (8, L_blk)

    kernel = functools.partial(_conv2x_kernel, W=W)

    out = pl.pallas_call(
        kernel,
        out_shape=jax.ShapeDtypeStruct((Cout_p, N_pad * HW), jnp.float32),
        grid_spec=pltpu.PrefetchScalarGridSpec(
            num_scalar_prefetch=0,
            grid=(G,),
            in_specs=[
                pl.BlockSpec((Cin_p, L_blk), lambda g: (0, g)),
                pl.BlockSpec((Cmid_p, 9 * Cin_p), lambda g: (0, 0)),
                pl.BlockSpec((Cout_p, 9 * Cmid_p), lambda g: (0, 0)),
                pl.BlockSpec((8, L_blk), lambda g: (0, 0)),
            ],
            out_specs=pl.BlockSpec((Cout_p, L_blk), lambda g: (0, g)),
        ),
        compiler_params=pltpu.CompilerParams(
            dimension_semantics=("parallel",)),
    )(xk, w1k, w2k, maskk)

    # (Cout_p, N_pad*HW) -> (N, Cout, H, W)
    out = out.reshape(Cout_p, N_pad, HW)
    out = jnp.transpose(out, (1, 0, 2))[:N, :Cout]
    return out.reshape(N, Cout, H, W)


def _reference_forward(x, w1, b1, w2, b2):
    """Pure-JAX reference matching PyTorch nn.Conv2d semantics."""
    dn = ('NCHW', 'OIHW', 'NCHW')
    y = jax.lax.conv_general_dilated(x, w1, (1, 1), ((1, 1), (1, 1)),
                                     dimension_numbers=dn)
    y = y + b1[None, :, None, None]
    y = jax.lax.conv_general_dilated(y, w2, (1, 1), ((1, 1), (1, 1)),
                                     dimension_numbers=dn)
    y = y + b2[None, :, None, None]
    return jnp.maximum(y, 0.0)


if __name__ == "__main__":
    # Module config: in_channels=4, out_channels=8 -> mid = ceil(sqrt(32)) = 6
    in_channels, out_channels = 4, 8
    mid_channels = ceil(sqrt(in_channels * out_channels))
    N, H, W = 2, 16, 16

    key = jax.random.PRNGKey(0)
    kx, k1, k2, k3, k4 = jax.random.split(key, 5)

    x = jax.random.normal(kx, (N, in_channels, H, W), dtype=jnp.float32)

    # deterministic PyTorch-style (uniform +- 1/sqrt(fan_in)) init
    bound1 = 1.0 / sqrt(in_channels * 9)
    w1 = jax.random.uniform(k1, (mid_channels, in_channels, 3, 3),
                            minval=-bound1, maxval=bound1, dtype=jnp.float32)
    b1 = jax.random.uniform(k2, (mid_channels,),
                            minval=-bound1, maxval=bound1, dtype=jnp.float32)
    bound2 = 1.0 / sqrt(mid_channels * 9)
    w2 = jax.random.uniform(k3, (out_channels, mid_channels, 3, 3),
                            minval=-bound2, maxval=bound2, dtype=jnp.float32)
    b2 = jax.random.uniform(k4, (out_channels,),
                            minval=-bound2, maxval=bound2, dtype=jnp.float32)

    out = keep_size_conv2d_layer_x2_ss(x, w1, b1, w2, b2)
    out = jax.block_until_ready(out)

    ref = jax.block_until_ready(_reference_forward(x, w1, b1, w2, b2))
    assert out.shape == (N, out_channels, H, W), out.shape
    assert jnp.allclose(out, ref, atol=1e-4, rtol=1e-4), \
        float(jnp.max(jnp.abs(out - ref)))

    print("KERNEL_OK")
</pallas_src>

<mosaic_0001>
module attributes {stable_mosaic.version = 11 : i64} {
  func.func @_conv2x_kernel(%arg0: i32, %arg1: memref<8x256xf32, #tpu.memory_space<vmem>>, %arg2: memref<8x72xf32, #tpu.memory_space<vmem>>, %arg3: memref<8x72xf32, #tpu.memory_space<vmem>>, %arg4: memref<8x256xf32, #tpu.memory_space<vmem>>, %arg5: memref<8x256xf32, #tpu.memory_space<vmem>>) attributes {dimension_semantics = [#tpu.dimension_semantics<parallel>], iteration_bounds = array<i64: 2>, scalar_prefetch = 0 : i64, scratch_operands = 0 : i64, tpu.core_type = #tpu.core_type<tc>, window_params = [{transform_indices = @transform_0, window_bounds = array<i64: 8, 256>}, {pipeline_mode = #tpu.pipeline_mode<synchronous>, transform_indices = @transform_1, window_bounds = array<i64: 8, 72>}, {pipeline_mode = #tpu.pipeline_mode<synchronous>, transform_indices = @transform_2, window_bounds = array<i64: 8, 72>}, {pipeline_mode = #tpu.pipeline_mode<synchronous>, transform_indices = @transform_3, window_bounds = array<i64: 8, 256>}, {transform_indices = @transform_4, window_bounds = array<i64: 8, 256>}]} {
    %c0 = arith.constant 0 : index
    %c0_0 = arith.constant 0 : index
    %0 = vector.load %arg1[%c0, %c0_0] : memref<8x256xf32, #tpu.memory_space<vmem>>, vector<8x256xf32>
    %c0_1 = arith.constant 0 : index
    %c0_2 = arith.constant 0 : index
    %1 = vector.load %arg4[%c0_1, %c0_2] : memref<8x256xf32, #tpu.memory_space<vmem>>, vector<8x256xf32>
    %c0_3 = arith.constant 0 : index
    %c0_4 = arith.constant 0 : index
    %2 = vector.load %arg2[%c0_3, %c0_4] : memref<8x72xf32, #tpu.memory_space<vmem>>, vector<8x72xf32>
    %c17_i32 = arith.constant 17 : i32
    %3 = tpu.dynamic_rotate %0 by %c17_i32 dim 1 : vector<8x256xf32>, i32 -> vector<8x256xf32>
    %4 = vector.extract_strided_slice %1 {offsets = [0, 0], sizes = [1, 256], strides = [1, 1]} : vector<8x256xf32> to vector<1x256xf32>
    %5 = vector.broadcast %4 : vector<1x256xf32> to vector<8x256xf32>
    %6 = arith.mulf %3, %5 : vector<8x256xf32>
    %c16_i32 = arith.constant 16 : i32
    %7 = tpu.dynamic_rotate %0 by %c16_i32 dim 1 : vector<8x256xf32>, i32 -> vector<8x256xf32>
    %8 = vector.extract_strided_slice %1 {offsets = [1, 0], sizes = [1, 256], strides = [1, 1]} : vector<8x256xf32> to vector<1x256xf32>
    %9 = vector.broadcast %8 : vector<1x256xf32> to vector<8x256xf32>
    %10 = arith.mulf %7, %9 : vector<8x256xf32>
    %c15_i32 = arith.constant 15 : i32
    %11 = tpu.dynamic_rotate %0 by %c15_i32 dim 1 : vector<8x256xf32>, i32 -> vector<8x256xf32>
    %12 = vector.extract_strided_slice %1 {offsets = [2, 0], sizes = [1, 256], strides = [1, 1]} : vector<8x256xf32> to vector<1x256xf32>
    %13 = vector.broadcast %12 : vector<1x256xf32> to vector<8x256xf32>
    %14 = arith.mulf %11, %13 : vector<8x256xf32>
    %c1_i32 = arith.constant 1 : i32
    %15 = tpu.dynamic_rotate %0 by %c1_i32 dim 1 : vector<8x256xf32>, i32 -> vector<8x256xf32>
    %16 = vector.extract_strided_slice %1 {offsets = [3, 0], sizes = [1, 256], strides = [1, 1]} : vector<8x256xf32> to vector<1x256xf32>
    %17 = vector.broadcast %16 : vector<1x256xf32> to vector<8x256xf32>
    %18 = arith.mulf %15, %17 : vector<8x256xf32>
    %c255_i32 = arith.constant 255 : i32
    %19 = tpu.dynamic_rotate %0 by %c255_i32 dim 1 : vector<8x256xf32>, i32 -> vector<8x256xf32>
    %20 = vector.extract_strided_slice %1 {offsets = [4, 0], sizes = [1, 256], strides = [1, 1]} : vector<8x256xf32> to vector<1x256xf32>
    %21 = vector.broadcast %20 : vector<1x256xf32> to vector<8x256xf32>
    %22 = arith.mulf %19, %21 : vector<8x256xf32>
    %c241_i32 = arith.constant 241 : i32
    %23 = tpu.dynamic_rotate %0 by %c241_i32 dim 1 : vector<8x256xf32>, i32 -> vector<8x256xf32>
    %24 = vector.extract_strided_slice %1 {offsets = [5, 0], sizes = [1, 256], strides = [1, 1]} : vector<8x256xf32> to vector<1x256xf32>
    %25 = vector.broadcast %24 : vector<1x256xf32> to vector<8x256xf32>
    %26 = arith.mulf %23, %25 : vector<8x256xf32>
    %c240_i32 = arith.constant 240 : i32
    %27 = tpu.dynamic_rotate %0 by %c240_i32 dim 1 : vector<8x256xf32>, i32 -> vector<8x256xf32>
    %28 = vector.extract_strided_slice %1 {offsets = [6, 0], sizes = [1, 256], strides = [1, 1]} : vector<8x256xf32> to vector<1x256xf32>
    %29 = vector.broadcast %28 : vector<1x256xf32> to vector<8x256xf32>
    %30 = arith.mulf %27, %29 : vector<8x256xf32>
    %c239_i32 = arith.constant 239 : i32
    %31 = tpu.dynamic_rotate %0 by %c239_i32 dim 1 : vector<8x256xf32>, i32 -> vector<8x256xf32>
    %32 = vector.extract_strided_slice %1 {offsets = [7, 0], sizes = [1, 256], strides = [1, 1]} : vector<8x256xf32> to vector<1x256xf32>
    %33 = vector.broadcast %32 : vector<1x256xf32> to vector<8x256xf32>
    %34 = arith.mulf %31, %33 : vector<8x256xf32>
    %35 = tpu.concatenate %6, %10, %14, %18, %0, %22, %26, %30, %34 in 0 : vector<8x256xf32>, vector<8x256xf32>, vector<8x256xf32>, vector<8x256xf32>, vector<8x256xf32>, vector<8x256xf32>, vector<8x256xf32>, vector<8x256xf32>, vector<8x256xf32> -> vector<72x256xf32>
    %cst = arith.constant dense<0.000000e+00> : vector<8x256xf32>
    %36 = tpu.matmul %2, %35, %cst {dimension_numbers = #tpu.dot_dimension_numbers<[1], [0], [0], [1], [0, 0, 1, 1], [], []>} : vector<8x72xf32>, vector<72x256xf32>, vector<8x256xf32> -> vector<8x256xf32>
    %c0_5 = arith.constant 0 : index
    %c0_6 = arith.constant 0 : index
    %37 = vector.load %arg3[%c0_5, %c0_6] : memref<8x72xf32, #tpu.memory_space<vmem>>, vector<8x72xf32>
    %c17_i32_7 = arith.constant 17 : i32
    %38 = tpu.dynamic_rotate %36 by %c17_i32_7 dim 1 : vector<8x256xf32>, i32 -> vector<8x256xf32>
    %39 = vector.extract_strided_slice %1 {offsets = [0, 0], sizes = [1, 256], strides = [1, 1]} : vector<8x256xf32> to vector<1x256xf32>
    %40 = vector.broadcast %39 : vector<1x256xf32> to vector<8x256xf32>
    %41 = arith.mulf %38, %40 : vector<8x256xf32>
    %c16_i32_8 = arith.constant 16 : i32
    %42 = tpu.dynamic_rotate %36 by %c16_i32_8 dim 1 : vector<8x256xf32>, i32 -> vector<8x256xf32>
    %43 = vector.extract_strided_slice %1 {offsets = [1, 0], sizes = [1, 256], strides = [1, 1]} : vector<8x256xf32> to vector<1x256xf32>
    %44 = vector.broadcast %43 : vector<1x256xf32> to vector<8x256xf32>
    %45 = arith.mulf %42, %44 : vector<8x256xf32>
    %c15_i32_9 = arith.constant 15 : i32
    %46 = tpu.dynamic_rotate %36 by %c15_i32_9 dim 1 : vector<8x256xf32>, i32 -> vector<8x256xf32>
    %47 = vector.extract_strided_slice %1 {offsets = [2, 0], sizes = [1, 256], strides = [1, 1]} : vector<8x256xf32> to vector<1x256xf32>
    %48 = vector.broadcast %47 : vector<1x256xf32> to vector<8x256xf32>
    %49 = arith.mulf %46, %48 : vector<8x256xf32>
    %c1_i32_10 = arith.constant 1 : i32
    %50 = tpu.dynamic_rotate %36 by %c1_i32_10 dim 1 : vector<8x256xf32>, i32 -> vector<8x256xf32>
    %51 = vector.extract_strided_slice %1 {offsets = [3, 0], sizes = [1, 256], strides = [1, 1]} : vector<8x256xf32> to vector<1x256xf32>
    %52 = vector.broadcast %51 : vector<1x256xf32> to vector<8x256xf32>
    %53 = arith.mulf %50, %52 : vector<8x256xf32>
    %c255_i32_11 = arith.constant 255 : i32
    %54 = tpu.dynamic_rotate %36 by %c255_i32_11 dim 1 : vector<8x256xf32>, i32 -> vector<8x256xf32>
    %55 = vector.extract_strided_slice %1 {offsets = [4, 0], sizes = [1, 256], strides = [1, 1]} : vector<8x256xf32> to vector<1x256xf32>
    %56 = vector.broadcast %55 : vector<1x256xf32> to vector<8x256xf32>
    %57 = arith.mulf %54, %56 : vector<8x256xf32>
    %c241_i32_12 = arith.constant 241 : i32
    %58 = tpu.dynamic_rotate %36 by %c241_i32_12 dim 1 : vector<8x256xf32>, i32 -> vector<8x256xf32>
    %59 = vector.extract_strided_slice %1 {offsets = [5, 0], sizes = [1, 256], strides = [1, 1]} : vector<8x256xf32> to vector<1x256xf32>
    %60 = vector.broadcast %59 : vector<1x256xf32> to vector<8x256xf32>
    %61 = arith.mulf %58, %60 : vector<8x256xf32>
    %c240_i32_13 = arith.constant 240 : i32
    %62 = tpu.dynamic_rotate %36 by %c240_i32_13 dim 1 : vector<8x256xf32>, i32 -> vector<8x256xf32>
    %63 = vector.extract_strided_slice %1 {offsets = [6, 0], sizes = [1, 256], strides = [1, 1]} : vector<8x256xf32> to vector<1x256xf32>
    %64 = vector.broadcast %63 : vector<1x256xf32> to vector<8x256xf32>
    %65 = arith.mulf %62, %64 : vector<8x256xf32>
    %c239_i32_14 = arith.constant 239 : i32
    %66 = tpu.dynamic_rotate %36 by %c239_i32_14 dim 1 : vector<8x256xf32>, i32 -> vector<8x256xf32>
    %67 = vector.extract_strided_slice %1 {offsets = [7, 0], sizes = [1, 256], strides = [1, 1]} : vector<8x256xf32> to vector<1x256xf32>
    %68 = vector.broadcast %67 : vector<1x256xf32> to vector<8x256xf32>
    %69 = arith.mulf %66, %68 : vector<8x256xf32>
    %70 = tpu.concatenate %41, %45, %49, %53, %36, %57, %61, %65, %69 in 0 : vector<8x256xf32>, vector<8x256xf32>, vector<8x256xf32>, vector<8x256xf32>, vector<8x256xf32>, vector<8x256xf32>, vector<8x256xf32>, vector<8x256xf32>, vector<8x256xf32> -> vector<72x256xf32>
    %cst_15 = arith.constant dense<0.000000e+00> : vector<8x256xf32>
    %71 = tpu.matmul %37, %70, %cst_15 {dimension_numbers = #tpu.dot_dimension_numbers<[1], [0], [0], [1], [0, 0, 1, 1], [], []>} : vector<8x72xf32>, vector<72x256xf32>, vector<8x256xf32> -> vector<8x256xf32>
    %cst_16 = arith.constant 0.000000e+00 : f32
    %72 = vector.broadcast %cst_16 : f32 to vector<8x256xf32>
    %73 = arith.maximumf %71, %72 : vector<8x256xf32>
    %c0_17 = arith.constant 0 : index
    %c0_18 = arith.constant 0 : index
    %74 = vector.load %arg5[%c0_17, %c0_18] : memref<8x256xf32, #tpu.memory_space<vmem>>, vector<8x256xf32>
    tpu.vector_store %arg5[%c0_17, %c0_18], %73 {strides = array<i32>} : memref<8x256xf32, #tpu.memory_space<vmem>>, vector<8x256xf32>,
    return
  }
  func.func @transform_0(%arg0: i32) -> (i32, i32) {
    %c0_i32 = arith.constant 0 : i32
    %c0_i32_0 = arith.constant 0 : i32
    return %c0_i32, %arg0 : i32, i32
  }
  func.func @transform_1(%arg0: i32) -> (i32, i32) {
    %c0_i32 = arith.constant 0 : i32
    %c0_i32_0 = arith.constant 0 : i32
    %c0_i32_1 = arith.constant 0 : i32
    return %c0_i32, %c0_i32_0 : i32, i32
  }
  func.func @transform_2(%arg0: i32) -> (i32, i32) {
    %c0_i32 = arith.constant 0 : i32
    %c0_i32_0 = arith.constant 0 : i32
    %c0_i32_1 = arith.constant 0 : i32
    return %c0_i32, %c0_i32_0 : i32, i32
  }
  func.func @transform_3(%arg0: i32) -> (i32, i32) {
    %c0_i32 = arith.constant 0 : i32
    %c0_i32_0 = arith.constant 0 : i32
    %c0_i32_1 = arith.constant 0 : i32
    return %c0_i32, %c0_i32_0 : i32, i32
  }
  func.func @transform_4(%arg0: i32) -> (i32, i32) {
    %c0_i32 = arith.constant 0 : i32
    %c0_i32_0 = arith.constant 0 : i32
    return %c0_i32, %arg0 : i32, i32
  }
}

</mosaic_0001>

<llo_original>
// kernel: tpu_custom_call.1
$region0: #{tpu_custom_call.1}
  #allocation0 [shape = 'u32[]', space=smem, size = 0x4, offset = 0x4, fixed_abs, tag = 'smem constant byte address 0x4 - core index']
  #allocation1 [shape = 'u32[144,128]{1,0:T(1,128)}', space=vmem, size = 0x12000, scoped, tag = 'internal scratch']
  %s0 = inlined_call_operand.hbm [shape: f32[8,512], index: 0, kind: input, shape index: {}]
  %s1 = inlined_call_operand.hbm [shape: f32[8,72], index: 1, kind: input, shape index: {}]
  %s2 = inlined_call_operand.hbm [shape: f32[8,72], index: 2, kind: input, shape index: {}]
  %s3 = inlined_call_operand.hbm [shape: f32[8,256], index: 3, kind: input, shape index: {}]
  %s4 = inlined_call_operand.hbm [shape: f32[8,512], index: 4, kind: output, shape index: {}]
  %s5 = sld [smem:[#allocation0]]
  $region65: #{tpu_custom_call.1} parent=0
    _
  %s7 = ssub.s32 1, %s5
  %s8 = scalar_select 0, %s7, %s5
  $region1: #{tpu_custom_call.1} parent=0
    #allocation2 [shape = 'u8[16384]{0}', space=vmem, size = 0x4000, scoped, tag = 'input window, operand 0']
    #allocation3 [shape = 's32[2]{0}', space=sflag, size = 0x8, scoped, tag = 'scoped memory for tpu_custom_call.1']
    #allocation4 [shape = 's32[2]{0}', space=sflag, size = 0x8, scoped, tag = 'scoped memory for tpu_custom_call.1']
    #allocation5 [shape = 'u8[4096]{0}', space=vmem, size = 0x1000, scoped, tag = 'input window, operand 1, single buffered']
    #allocation6 [shape = 's32[1]{0}', space=sflag, size = 0x4, scoped, tag = 'scoped memory for tpu_custom_call.1']
    #allocation7 [shape = 'u8[4096]{0}', space=vmem, size = 0x1000, scoped, tag = 'input window, operand 2, single buffered']
    #allocation8 [shape = 'u8[8192]{0}', space=vmem, size = 0x2000, scoped, tag = 'input window, operand 3, single buffered']
    #allocation9 [shape = 's32[1]{0}', space=sflag, size = 0x4, scoped, tag = 'scoped memory for tpu_custom_call.1']
    #allocation10 [shape = 'u8[16384]{0}', space=vmem, size = 0x4000, scoped, tag = 'output window, operand 0']
    %9 = vsyncpa [#allocation3], 0
    %s10 = scalar_lea.sflag [#allocation3], 1
    %11 = vsyncpa %s10, 0
    %12 = vsyncpa [#allocation6], 0
    %13 = vsyncpa [#allocation9], 0
    %14 = vsyncpa [#allocation4], 0
    %s15 = scalar_lea.sflag [#allocation4], 1
    %16 = vsyncpa %s15, 0
    loop: start=0, step=1, limit=4
    $region2: #{tpu_custom_call.1} parent=1 // loop_pre_header
      _
    $region3: #{tpu_custom_call.1} parent=1 // loop_header
      %s18 = sphi 0, %s22
      %p19 = scmp.ge.s32.totalorder %s18, 4
      %s28 = sphi 0, %s30
      %s31 = sphi 0, %s28
      %s32 = sphi 0, %s31
      %s48 = sphi 0, %s32
      %s52 = sphi 0, %s52
      %s54 = sphi 0, %s52
      %s55 = sphi 0, %s54
      %s69 = sphi 0, %s55
      %s73 = sphi 0, %s73
      %s75 = sphi 0, %s73
      %s76 = sphi 0, %s75
      %s90 = sphi 0, %s76
      %s94 = sphi 0, %s94
      %s96 = sphi 0, %s94
      %s97 = sphi 0, %s96
      %s111 = sphi 0, %s97
      %s117 = sphi 0, %s119
      %s120 = sphi 0, %s117
      %s121 = sphi 0, %s120
      %s137 = sphi 0, %s121
    $region4: #{tpu_custom_call.1} parent=1 // loop_header_branch
      %21 = sbr.rel (%p19) target = $region8
    $region5: #{tpu_custom_call.1} parent=1 // loop_body
      %s23 = ssub.s32 %s18, 1
      %s24 = ssub.s32 %s18, 2
      %s25 = sadd.s32 %s18, 1
      %s26 = ssub.s32 %s18, %s25
      %p27 = scmp.eq.s32.totalorder %s26, 0
      %s29 = sadd.s32 %s28, 1
      %s30 = scalar_select %p27, %s28, %s29
      %p33 = pneg %p27
      %p34 = scmp.eq.s32.totalorder %s18, 1
      %p35 = por %p33, %p34
      %p36 = scmp.ne.s32.totalorder %s28, %s31
      %p37 = scmp.eq.s32.totalorder %s18, 0
      %p38 = por %p36, %p37
      %p39 = scmp.ne.s32.totalorder %s28, %s31
      %p40 = scmp.eq.s32.totalorder %s23, 1
      %p41 = por %p39, %p40
      %p42 = scmp.ne.s32.totalorder %s31, %s32
      %p43 = scmp.eq.s32.totalorder %s23, 0
      %p44 = por %p42, %p43
      %p45 = scmp.ne.s32.totalorder %s31, %s32
      %p46 = scmp.eq.s32.totalorder %s24, 1
      %p47 = por %p45, %p46
      %p49 = scmp.ne.s32.totalorder %s32, %s48
      %p50 = scmp.eq.s32.totalorder %s24, 0
      %p51 = por %p49, %p50
      %s53 = sadd.s32 %s52, 1
      %p56 = scmp.eq.s32.totalorder %s18, 1
      %p57 = scmp.ne.s32.totalorder %s52, %s54
      %p58 = scmp.eq.s32.totalorder %s18, 0
      %p59 = por %p57, %p58
      %p60 = scmp.ne.s32.totalorder %s52, %s54
      %p61 = scmp.eq.s32.totalorder %s23, 1
      %p62 = por %p60, %p61
      %p63 = scmp.ne.s32.totalorder %s54, %s55
      %p64 = scmp.eq.s32.totalorder %s23, 0
      %p65 = por %p63, %p64
      %p66 = scmp.ne.s32.totalorder %s54, %s55
      %p67 = scmp.eq.s32.totalorder %s24, 1
      %p68 = por %p66, %p67
      %p70 = scmp.ne.s32.totalorder %s55, %s69
      %p71 = scmp.eq.s32.totalorder %s24, 0
      %p72 = por %p70, %p71
      %s74 = sadd.s32 %s73, 1
      %p77 = scmp.eq.s32.totalorder %s18, 1
      %p78 = scmp.ne.s32.totalorder %s73, %s75
      %p79 = scmp.eq.s32.totalorder %s18, 0
      %p80 = por %p78, %p79
      %p81 = scmp.ne.s32.totalorder %s73, %s75
      %p82 = scmp.eq.s32.totalorder %s23, 1
      %p83 = por %p81, %p82
      %p84 = scmp.ne.s32.totalorder %s75, %s76
      %p85 = scmp.eq.s32.totalorder %s23, 0
      %p86 = por %p84, %p85
      %p87 = scmp.ne.s32.totalorder %s75, %s76
      %p88 = scmp.eq.s32.totalorder %s24, 1
      %p89 = por %p87, %p88
      %p91 = scmp.ne.s32.totalorder %s76, %s90
      %p92 = scmp.eq.s32.totalorder %s24, 0
      %p93 = por %p91, %p92
      %s95 = sadd.s32 %s94, 1
      %p98 = scmp.eq.s32.totalorder %s18, 1
      %p99 = scmp.ne.s32.totalorder %s94, %s96
      %p100 = scmp.eq.s32.totalorder %s18, 0
      %p101 = por %p99, %p100
      %p102 = scmp.ne.s32.totalorder %s94, %s96
      %p103 = scmp.eq.s32.totalorder %s23, 1
      %p104 = por %p102, %p103
      %p105 = scmp.ne.s32.totalorder %s96, %s97
      %p106 = scmp.eq.s32.totalorder %s23, 0
      %p107 = por %p105, %p106
      %p108 = scmp.ne.s32.totalorder %s96, %s97
      %p109 = scmp.eq.s32.totalorder %s24, 1
      %p110 = por %p108, %p109
      %p112 = scmp.ne.s32.totalorder %s97, %s111
      %p113 = scmp.eq.s32.totalorder %s24, 0
      %p114 = por %p112, %p113
      %s115 = ssub.s32 %s18, %s25
      %p116 = scmp.eq.s32.totalorder %s115, 0
      %s118 = sadd.s32 %s117, 1
      %s119 = scalar_select %p116, %s117, %s118
      %p122 = pneg %p116
      %p123 = scmp.eq.s32.totalorder %s18, 1
      %p124 = por %p122, %p123
      %p125 = scmp.ne.s32.totalorder %s117, %s120
      %p126 = scmp.eq.s32.totalorder %s18, 0
      %p127 = por %p125, %p126
      %p128 = scmp.ne.s32.totalorder %s117, %s120
      %p129 = scmp.eq.s32.totalorder %s23, 1
      %p130 = por %p128, %p129
      %p131 = scmp.ne.s32.totalorder %s120, %s121
      %p132 = scmp.eq.s32.totalorder %s23, 0
      %p133 = por %p131, %p132
      %p134 = scmp.ne.s32.totalorder %s120, %s121
      %p135 = scmp.eq.s32.totalorder %s24, 1
      %p136 = por %p134, %p135
      %p138 = scmp.ne.s32.totalorder %s121, %s137
      %p139 = scmp.eq.s32.totalorder %s24, 0
      %p140 = por %p138, %p139
      %p141 = scmp.le.s32.totalorder 1, %s18
      %p142 = scmp.lt.s32.totalorder %s18, 3
      %p143 = pnand %p141, %p142
      %p144 = pneg %p143
      // Predicated region
      $region9: #{tpu_custom_call.1} parent=5 // pred_check
        _
      $region10: #{tpu_custom_call.1} parent=5 // pred_check_branch
        %146 = sbr.rel (%p143) target = $region12
      $region11: #{tpu_custom_call.1} parent=5 // pred_region
        %s147 = ssub.s32 %s18, 1
        // Predicated region
        $region13: #{tpu_custom_call.1} parent=11 // pred_check
          %p148 = pneg %p65
        $region14: #{tpu_custom_call.1} parent=11 // pred_check_branch
          %150 = sbr.rel (%p148) target = $region16
        $region15: #{tpu_custom_call.1} parent=11 // pred_region
          %s152 = ssub.s32 128, 128
          %153 = vsyncadd [#allocation6], %s152
          %s155 = sshll.u32 [#allocation5], 4
          %s156 = int_to_ptr.vmem [resolvable:$true] %s155
          %158 = dma.hbm_to_vmem [thread:$0]  %s1, 128, %s156, [#allocation6]
        $region16: #{tpu_custom_call.1} parent=11 // pred_fallthru
          _
        // Predicated region
        $region17: #{tpu_custom_call.1} parent=11 // pred_check
          %p159 = pneg %p86
        $region18: #{tpu_custom_call.1} parent=11 // pred_check_branch
          %161 = sbr.rel (%p159) target = $region20
        $region19: #{tpu_custom_call.1} parent=11 // pred_region
          %s163 = ssub.s32 128, 128
          %164 = vsyncadd [#allocation6], %s163
          %s166 = sshll.u32 [#allocation7], 4
          %s167 = int_to_ptr.vmem [resolvable:$true] %s166
          %169 = dma.hbm_to_vmem [thread:$0]  %s2, 128, %s167, [#allocation6]
        $region20: #{tpu_custom_call.1} parent=11 // pred_fallthru
          _
        // Predicated region
        $region21: #{tpu_custom_call.1} parent=11 // pred_check
          %p170 = pneg %p107
        $region22: #{tpu_custom_call.1} parent=11 // pred_check_branch
          %172 = sbr.rel (%p170) target = $region24
        $region23: #{tpu_custom_call.1} parent=11 // pred_region
          %s174 = ssub.s32 256, 256
          %175 = vsyncadd [#allocation9], %s174
          %s177 = sshll.u32 [#allocation8], 4
          %s178 = int_to_ptr.vmem [resolvable:$true] %s177
          %180 = dma.hbm_to_vmem [thread:$0]  %s3, 256, %s178, [#allocation9]
        $region24: #{tpu_custom_call.1} parent=11 // pred_fallthru
          _
      $region12: #{tpu_custom_call.1} parent=5 // pred_fallthru
        _
      %p181 = scmp.lt.s32.totalorder %s18, 2
      // Predicated region
      $region25: #{tpu_custom_call.1} parent=5 // pred_check
        %p182 = pneg %p181
      $region26: #{tpu_custom_call.1} parent=5 // pred_check_branch
        %184 = sbr.rel (%p182) target = $region28
      $region27: #{tpu_custom_call.1} parent=5 // pred_region
        // Predicated region
        $region29: #{tpu_custom_call.1} parent=27 // pred_check
          %p185 = pneg %p38
        $region30: #{tpu_custom_call.1} parent=27 // pred_check_branch
          %187 = sbr.rel (%p185) target = $region32
        $region31: #{tpu_custom_call.1} parent=27 // pred_region
          %s188 = sand.u32 %s28, 1
          %s189 = scalar_lea.sflag [#allocation3], %s188
          %s190 = sand.u32 %s28, 1
          %s191 = smul.addr %s190, 16
          %s192 = scalar_lea.vmem [#allocation2], %s191
          %s193 = smul.u32 2, %s18
          %s195 = ssub.s32 256, 256
          %196 = vsyncadd %s189, %s195
          %s197 = smul.addr %s193, 128
          %s198 = scalar_lea.hbm %s0, %s197
          %s200 = sshll.u32 %s192, 4
          %s201 = int_to_ptr.vmem [resolvable:$true] %s200
          %203 = dma.hbm_to_vmem [thread:$0]  %s198, 256, %s201, %s189
        $region32: #{tpu_custom_call.1} parent=27 // pred_fallthru
          _
      $region28: #{tpu_custom_call.1} parent=5 // pred_fallthru
        _
      %p204 = scmp.le.s32.totalorder 1, %s18
      %p205 = scmp.lt.s32.totalorder %s18, 3
      %p206 = pnand %p204, %p205
      %p207 = pneg %p206
      // Predicated region
      $region33: #{tpu_custom_call.1} parent=5 // pred_check
        _
      $region34: #{tpu_custom_call.1} parent=5 // pred_check_branch
        %209 = sbr.rel (%p206) target = $region36
      $region35: #{tpu_custom_call.1} parent=5 // pred_region
        %s210 = ssub.s32 %s18, 1
        %s211 = sand.u32 %s31, 1
        %s212 = scalar_lea.sflag [#allocation3], %s211
        %s213 = sand.u32 %s31, 1
        %s214 = smul.addr %s213, 16
        %s215 = scalar_lea.vmem [#allocation2], %s214
        // Predicated region
        $region37: #{tpu_custom_call.1} parent=35 // pred_check
          %p216 = pneg %p44
        $region38: #{tpu_custom_call.1} parent=35 // pred_check_branch
          %218 = sbr.rel (%p216) target = $region40
        $region39: #{tpu_custom_call.1} parent=35 // pred_region
          %219 = dma.done %s212, 256
        $region40: #{tpu_custom_call.1} parent=35 // pred_fallthru
          _
        // Predicated region
        $region41: #{tpu_custom_call.1} parent=35 // pred_check
          %p220 = pneg %p65
        $region42: #{tpu_custom_call.1} parent=35 // pred_check_branch
          %222 = sbr.rel (%p220) target = $region44
        $region43: #{tpu_custom_call.1} parent=35 // pred_region
          %223 = dma.done [#allocation6], 128
        $region44: #{tpu_custom_call.1} parent=35 // pred_fallthru
          _
        // Predicated region
        $region45: #{tpu_custom_call.1} parent=35 // pred_check
          %p224 = pneg %p86
        $region46: #{tpu_custom_call.1} parent=35 // pred_check_branch
          %226 = sbr.rel (%p224) target = $region48
        $region47: #{tpu_custom_call.1} parent=35 // pred_region
          %227 = dma.done [#allocation6], 128
        $region48: #{tpu_custom_call.1} parent=35 // pred_fallthru
          _
        // Predicated region
        $region49: #{tpu_custom_call.1} parent=35 // pred_check
          %p228 = pneg %p107
        $region50: #{tpu_custom_call.1} parent=35 // pred_check_branch
          %230 = sbr.rel (%p228) target = $region52
        $region51: #{tpu_custom_call.1} parent=35 // pred_region
          %231 = dma.done [#allocation9], 256
        $region52: #{tpu_custom_call.1} parent=35 // pred_fallthru
          _
        %s232 = sand.u32 %s31, 1
        %s233 = scalar_lea.sflag [#allocation3], %s232
        %s234 = sand.u32 %s31, 1
        %s235 = smul.addr %s234, 16
        %s236 = scalar_lea.vmem [#allocation2], %s235
        %p237 = pneg %p44
        %p238 = pneg %p41
        %p239 = pneg %p65
        %p240 = pneg %p62
        %p241 = pneg %p86
        %p242 = pneg %p83
        %p243 = pneg %p107
        %p244 = pneg %p104
        %p245 = pneg %p133
        %p246 = pneg %p130
        %s247 = sand.u32 %s120, 1
        %s248 = scalar_lea.sflag [#allocation4], %s247
        %s249 = sand.u32 %s120, 1
        %s250 = smul.addr %s249, 16
        %s251 = scalar_lea.vmem [#allocation10], %s250
        %s252 = smul.u32 2, %s23
        %s253 = smul.u32 2, %s23
        %v254 = vld [vmem:[%s215] sm:$0xff]
        %v255 = vld [vmem:[%s215 + $0x8] sm:$0xff]
        %v256 = vld [vmem:[#allocation8] sm:$0xff]
        %v257 = vld [vmem:[#allocation8 + $0x8] sm:$0xff]
        %v258 = vld [vmem:[#allocation5] sm:$0xff]
        %259 = vrot.lane.b32.xlu0 %v254, 17
        %v260 = vpop.permute.xlu0 %259
        %261 = vrot.lane.b32.xlu0 %v255, 17
        %v262 = vpop.permute.xlu0 %261
        %v263 = vlaneseq
        %v264 = vand.u32 %v263, 127
        %vm265 = vcmp.lt.s32.totalorder %v264, 17
        %v266 = vsel %vm265, %v260, %v262
        %v267 = vsel %vm265, %v262, %v260
        %v268 = vlaneseq
        %v269 = vshrl.u32 %v268, 7
        %v270 = vsub.s32 0, %v269
        %v271 = vrot.slane %v256, %v270
        %v272 = vlaneseq
        %v273 = vshrl.u32 %v272, 7
        %v274 = vsub.s32 0, %v273
        %v275 = vrot.slane %v257, %v274
        %v276 = vmul.f32 %v267, %v271
        %v277 = vmul.f32 %v266, %v275
        %278 = vrot.lane.b32.xlu0 %v254, 16
        %v279 = vpop.permute.xlu0 %278
        %280 = vrot.lane.b32.xlu0 %v255, 16
        %v281 = vpop.permute.xlu0 %280
        %vm282 = vcmp.lt.s32.totalorder %v264, 16
        %v283 = vsel %vm282, %v279, %v281
        %v284 = vsel %vm282, %v281, %v279
        %v285 = vlaneseq
        %v286 = vshrl.u32 %v285, 7
        %v287 = vsub.s32 1, %v286
        %v288 = vrot.slane %v256, %v287
        %v289 = vlaneseq
        %v290 = vshrl.u32 %v289, 7
        %v291 = vsub.s32 1, %v290
        %v292 = vrot.slane %v257, %v291
        %v293 = vmul.f32 %v284, %v288
        %v294 = vmul.f32 %v283, %v292
        %295 = vrot.lane.b32.xlu0 %v254, 15
        %v296 = vpop.permute.xlu0 %295
        %297 = vrot.lane.b32.xlu0 %v255, 15
        %v298 = vpop.permute.xlu0 %297
        %vm299 = vcmp.lt.s32.totalorder %v264, 15
        %v300 = vsel %vm299, %v296, %v298
        %v301 = vsel %vm299, %v298, %v296
        %v302 = vlaneseq
        %v303 = vshrl.u32 %v302, 7
        %v304 = vsub.s32 2, %v303
        %v305 = vrot.slane %v256, %v304
        %v306 = vlaneseq
        %v307 = vshrl.u32 %v306, 7
        %v308 = vsub.s32 2, %v307
        %v309 = vrot.slane %v257, %v308
        %v310 = vmul.f32 %v301, %v305
        %v311 = vmul.f32 %v300, %v309
        %312 = vrot.lane.b32.xlu0 %v254, 1
        %v313 = vpop.permute.xlu0 %312
        %314 = vrot.lane.b32.xlu0 %v255, 1
        %v315 = vpop.permute.xlu0 %314
        %vm316 = vcmp.lt.s32.totalorder %v264, 1
        %v317 = vsel %vm316, %v313, %v315
        %v318 = vsel %vm316, %v315, %v313
        %v319 = vlaneseq
        %v320 = vshrl.u32 %v319, 7
        %v321 = vsub.s32 3, %v320
        %v322 = vrot.slane %v256, %v321
        %v323 = vlaneseq
        %v324 = vshrl.u32 %v323, 7
        %v325 = vsub.s32 3, %v324
        %v326 = vrot.slane %v257, %v325
        %v327 = vmul.f32 %v318, %v322
        %v328 = vmul.f32 %v317, %v326
        %329 = vrot.lane.b32.xlu0 %v254, 127
        %v330 = vpop.permute.xlu0 %329
        %331 = vrot.lane.b32.xlu0 %v255, 127
        %v332 = vpop.permute.xlu0 %331
        %vm333 = vcmp.lt.s32.totalorder %v264, 127
        %v334 = vsel %vm333, %v330, %v332
        %v335 = vsel %vm333, %v332, %v330
        %v336 = vlaneseq
        %v337 = vshrl.u32 %v336, 7
        %v338 = vsub.s32 4, %v337
        %v339 = vrot.slane %v256, %v338
        %v340 = vlaneseq
        %v341 = vshrl.u32 %v340, 7
        %v342 = vsub.s32 4, %v341
        %v343 = vrot.slane %v257, %v342
        %v344 = vmul.f32 %v334, %v339
        %v345 = vmul.f32 %v335, %v343
        %346 = vrot.lane.b32.xlu0 %v254, 113
        %v347 = vpop.permute.xlu0 %346
        %348 = vrot.lane.b32.xlu0 %v255, 113
        %v349 = vpop.permute.xlu0 %348
        %vm350 = vcmp.lt.s32.totalorder %v264, 113
        %v351 = vsel %vm350, %v347, %v349
        %v352 = vsel %vm350, %v349, %v347
        %v353 = vlaneseq
        %v354 = vshrl.u32 %v353, 7
        %v355 = vsub.s32 5, %v354
        %v356 = vrot.slane %v256, %v355
        %v357 = vlaneseq
        %v358 = vshrl.u32 %v357, 7
        %v359 = vsub.s32 5, %v358
        %v360 = vrot.slane %v257, %v359
        %v361 = vmul.f32 %v351, %v356
        %v362 = vmul.f32 %v352, %v360
        %363 = vrot.lane.b32.xlu0 %v254, 112
        %v364 = vpop.permute.xlu0 %363
        %365 = vrot.lane.b32.xlu0 %v255, 112
        %v366 = vpop.permute.xlu0 %365
        %vm367 = vcmp.lt.s32.totalorder %v264, 112
        %v368 = vsel %vm367, %v364, %v366
        %v369 = vsel %vm367, %v366, %v364
        %v370 = vlaneseq
        %v371 = vshrl.u32 %v370, 7
        %v372 = vsub.s32 6, %v371
        %v373 = vrot.slane %v256, %v372
        %v374 = vlaneseq
        %v375 = vshrl.u32 %v374, 7
        %v376 = vsub.s32 6, %v375
        %v377 = vrot.slane %v257, %v376
        %v378 = vmul.f32 %v368, %v373
        %v379 = vmul.f32 %v369, %v377
        %380 = vrot.lane.b32.xlu0 %v254, 111
        %v381 = vpop.permute.xlu0 %380
        %382 = vrot.lane.b32.xlu0 %v255, 111
        %v383 = vpop.permute.xlu0 %382
        %vm384 = vcmp.lt.s32.totalorder %v264, 111
        %v385 = vsel %vm384, %v381, %v383
        %v386 = vsel %vm384, %v383, %v381
        %v387 = vlaneseq
        %v388 = vshrl.u32 %v387, 7
        %v389 = vsub.s32 7, %v388
        %v390 = vrot.slane %v256, %v389
        %v391 = vlaneseq
        %v392 = vshrl.u32 %v391, 7
        %v393 = vsub.s32 7, %v392
        %v394 = vrot.slane %v257, %v393
        %v395 = vmul.f32 %v385, %v390
        %v396 = vmul.f32 %v386, %v394
        %vm397 = vcmask 588800
        %v399 = vsel %vm397, %v258, 0
        %401 = vmatprep.subr.mxu0 0.0
        %402 = vmatpush1.msra.mxu0 0.0
        %403 = vmatprep.subr.mxu0 0.0
        %404 = vmatpush1.msra.mxu0 0.0
        %405 = vmatprep.subr.mxu0 0.0
        %406 = vmatpush1.msra.mxu0 0.0
        %407 = vmatprep.subr.mxu0 0.0
        %408 = vmatpush1.msra.mxu0 0.0
        %409 = vmatprep.subr.mxu0 0.0
        %410 = vmatpush1.msra.mxu0 0.0
        %411 = vmatprep.subr.mxu0 0.0
        %412 = vmatpush1.msra.mxu0 0.0
        %413 = vmatprep.subr.mxu0 0.0
        %414 = vmatpush1.msra.mxu0 0.0
        %415 = vmatprep.subr.mxu0 %v396
        %416 = vmatpush1.msra.mxu0 %v395
        %417 = vmatprep.subr.mxu0 %v379
        %418 = vmatpush1.msra.mxu0 %v378
        %419 = vmatprep.subr.mxu0 %v362
        %420 = vmatpush1.msra.mxu0 %v361
        %421 = vmatprep.subr.mxu0 %v345
        %422 = vmatpush1.msra.mxu0 %v344
        %423 = vmatprep.subr.mxu0 %v255
        %424 = vmatpush1.msra.mxu0 %v254
        %425 = vmatprep.subr.mxu0 %v328
        %426 = vmatpush1.msra.mxu0 %v327
        %427 = vmatprep.subr.mxu0 %v311
        %428 = vmatpush1.msra.mxu0 %v310
        %429 = vmatprep.subr.mxu0 %v294
        %430 = vmatpush1.msra.mxu0 %v293
        %431 = vmatprep.subr.mxu0 %v277
        %432 = vmatpush1.msra.mxu0 %v276
        %433 = vmatprep.subr.mxu0 0.0
        %434 = vmatpush2.msra.mxu0 0.0
        %435 = vmatprep.subr.mxu0 0.0
        %436 = vmatpush2.msra.mxu0 0.0
        %437 = vmatprep.subr.mxu0 0.0
        %438 = vmatpush2.msra.mxu0 0.0
        %439 = vmatprep.subr.mxu0 0.0
        %440 = vmatpush2.msra.mxu0 0.0
        %441 = vmatprep.subr.mxu0 0.0
        %442 = vmatpush2.msra.mxu0 0.0
        %443 = vmatprep.subr.mxu0 0.0
        %444 = vmatpush2.msra.mxu0 0.0
        %445 = vmatprep.subr.mxu0 0.0
        %446 = vmatpush2.msra.mxu0 0.0
        %447 = vmatprep.subr.mxu0 0.0
        %448 = vmatpush2.msra.mxu0 0.0
        %449 = vmatprep.subr.mxu0 0.0
        %450 = vmatpush2.msra.mxu0 0.0
        %451 = vmatprep.subr.mxu0 0.0
        %452 = vmatpush2.msra.mxu0 0.0
        %453 = vmatprep.subr.mxu0 0.0
        %454 = vmatpush2.msra.mxu0 0.0
        %455 = vmatprep.subr.mxu0 0.0
        %456 = vmatpush2.msra.mxu0 0.0
        %457 = vmatprep.subr.mxu0 0.0
        %458 = vmatpush2.msra.mxu0 0.0
        %459 = vmatprep.subr.mxu0 0.0
        %460 = vmatpush2.msra.mxu0 0.0
        %461 = vmatprep.subr.mxu0 0.0
        %462 = vmatpush2.msra.mxu0 0.0
        %463 = vmatprep.subr.mxu0 0.0
        %464 = vmatpush2.msra.mxu0 0.0
        %465 = vmatprep.mubr.f32.mxu0 0.0
        %466 = vmatmul.mubr.f32.gmra.mxu0 %v399
        %v467 = vpop.f32.mrf.mxu0
        %v468 = vadd.f32 0.0, %v467
        %v469 = vpop.f32.mrf.mxu0
        %v470 = vadd.f32 0.0, %v469
        %471 = vdwg.mxu0
        %v472 = vld [vmem:[#allocation7] sm:$0xff]
        %473 = vrot.lane.b32.xlu0 %v468, 17
        %v474 = vpop.permute.xlu0 %473
        %475 = vrot.lane.b32.xlu0 %v470, 17
        %v476 = vpop.permute.xlu0 %475
        %v477 = vsel %vm265, %v474, %v476
        %v478 = vsel %vm265, %v476, %v474
        %v479 = vmul.f32 %v478, %v271
        %v480 = vmul.f32 %v477, %v275
        %481 = vrot.lane.b32.xlu0 %v468, 16
        %v482 = vpop.permute.xlu0 %481
        %483 = vrot.lane.b32.xlu0 %v470, 16
        %v484 = vpop.permute.xlu0 %483
        %v485 = vsel %vm282, %v482, %v484
        %v486 = vsel %vm282, %v484, %v482
        %v487 = vmul.f32 %v486, %v288
        %v488 = vmul.f32 %v485, %v292
        %489 = vrot.lane.b32.xlu0 %v468, 15
        %v490 = vpop.permute.xlu0 %489
        %491 = vrot.lane.b32.xlu0 %v470, 15
        %v492 = vpop.permute.xlu0 %491
        %v493 = vsel %vm299, %v490, %v492
        %v494 = vsel %vm299, %v492, %v490
        %v495 = vmul.f32 %v494, %v305
        %v496 = vmul.f32 %v493, %v309
        %497 = vrot.lane.b32.xlu0 %v468, 1
        %v498 = vpop.permute.xlu0 %497
        %499 = vrot.lane.b32.xlu0 %v470, 1
        %v500 = vpop.permute.xlu0 %499
        %v501 = vsel %vm316, %v498, %v500
        %v502 = vsel %vm316, %v500, %v498
        %v503 = vmul.f32 %v502, %v322
        %v504 = vmul.f32 %v501, %v326
        %505 = vrot.lane.b32.xlu0 %v468, 127
        %v506 = vpop.permute.xlu0 %505
        %507 = vrot.lane.b32.xlu0 %v470, 127
        %v508 = vpop.permute.xlu0 %507
        %v509 = vsel %vm333, %v506, %v508
        %v510 = vsel %vm333, %v508, %v506
        %v511 = vmul.f32 %v509, %v339
        %v512 = vmul.f32 %v510, %v343
        %513 = vrot.lane.b32.xlu0 %v468, 113
        %v514 = vpop.permute.xlu0 %513
        %515 = vrot.lane.b32.xlu0 %v470, 113
        %v516 = vpop.permute.xlu0 %515
        %v517 = vsel %vm350, %v514, %v516
        %v518 = vsel %vm350, %v516, %v514
        %v519 = vmul.f32 %v517, %v356
        %v520 = vmul.f32 %v518, %v360
        %521 = vrot.lane.b32.xlu0 %v468, 112
        %v522 = vpop.permute.xlu0 %521
        %523 = vrot.lane.b32.xlu0 %v470, 112
        %v524 = vpop.permute.xlu0 %523
        %v525 = vsel %vm367, %v522, %v524
        %v526 = vsel %vm367, %v524, %v522
        %v527 = vmul.f32 %v525, %v373
        %v528 = vmul.f32 %v526, %v377
        %529 = vrot.lane.b32.xlu0 %v468, 111
        %v530 = vpop.permute.xlu0 %529
        %531 = vrot.lane.b32.xlu0 %v470, 111
        %v532 = vpop.permute.xlu0 %531
        %v533 = vsel %vm384, %v530, %v532
        %v534 = vsel %vm384, %v532, %v530
        %v535 = vmul.f32 %v533, %v390
        %v536 = vmul.f32 %v534, %v394
        %v538 = vsel %vm397, %v472, 0
        %540 = vmatprep.subr.mxu0 0.0
        %541 = vmatpush1.msra.mxu0 0.0
        %542 = vmatprep.subr.mxu0 0.0
        %543 = vmatpush1.msra.mxu0 0.0
        %544 = vmatprep.subr.mxu0 0.0
        %545 = vmatpush1.msra.mxu0 0.0
        %546 = vmatprep.subr.mxu0 0.0
        %547 = vmatpush1.msra.mxu0 0.0
        %548 = vmatprep.subr.mxu0 0.0
        %549 = vmatpush1.msra.mxu0 0.0
        %550 = vmatprep.subr.mxu0 0.0
        %551 = vmatpush1.msra.mxu0 0.0
        %552 = vmatprep.subr.mxu0 0.0
        %553 = vmatpush1.msra.mxu0 0.0
        %554 = vmatprep.subr.mxu0 %v536
        %555 = vmatpush1.msra.mxu0 %v535
        %556 = vmatprep.subr.mxu0 %v528
        %557 = vmatpush1.msra.mxu0 %v527
        %558 = vmatprep.subr.mxu0 %v520
        %559 = vmatpush1.msra.mxu0 %v519
        %560 = vmatprep.subr.mxu0 %v512
        %561 = vmatpush1.msra.mxu0 %v511
        %562 = vmatprep.subr.mxu0 %v470
        %563 = vmatpush1.msra.mxu0 %v468
        %564 = vmatprep.subr.mxu0 %v504
        %565 = vmatpush1.msra.mxu0 %v503
        %566 = vmatprep.subr.mxu0 %v496
        %567 = vmatpush1.msra.mxu0 %v495
        %568 = vmatprep.subr.mxu0 %v488
        %569 = vmatpush1.msra.mxu0 %v487
        %570 = vmatprep.subr.mxu0 %v480
        %571 = vmatpush1.msra.mxu0 %v479
        %572 = vmatprep.subr.mxu0 0.0
        %573 = vmatpush2.msra.mxu0 0.0
        %574 = vmatprep.subr.mxu0 0.0
        %575 = vmatpush2.msra.mxu0 0.0
        %576 = vmatprep.subr.mxu0 0.0
        %577 = vmatpush2.msra.mxu0 0.0
        %578 = vmatprep.subr.mxu0 0.0
        %579 = vmatpush2.msra.mxu0 0.0
        %580 = vmatprep.subr.mxu0 0.0
        %581 = vmatpush2.msra.mxu0 0.0
        %582 = vmatprep.subr.mxu0 0.0
        %583 = vmatpush2.msra.mxu0 0.0
        %584 = vmatprep.subr.mxu0 0.0
        %585 = vmatpush2.msra.mxu0 0.0
        %586 = vmatprep.subr.mxu0 0.0
        %587 = vmatpush2.msra.mxu0 0.0
        %588 = vmatprep.subr.mxu0 0.0
        %589 = vmatpush2.msra.mxu0 0.0
        %590 = vmatprep.subr.mxu0 0.0
        %591 = vmatpush2.msra.mxu0 0.0
        %592 = vmatprep.subr.mxu0 0.0
        %593 = vmatpush2.msra.mxu0 0.0
        %594 = vmatprep.subr.mxu0 0.0
        %595 = vmatpush2.msra.mxu0 0.0
        %596 = vmatprep.subr.mxu0 0.0
        %597 = vmatpush2.msra.mxu0 0.0
        %598 = vmatprep.subr.mxu0 0.0
        %599 = vmatpush2.msra.mxu0 0.0
        %600 = vmatprep.subr.mxu0 0.0
        %601 = vmatpush2.msra.mxu0 0.0
        %602 = vmatprep.subr.mxu0 0.0
        %603 = vmatpush2.msra.mxu0 0.0
        %604 = vmatprep.mubr.f32.mxu0 0.0
        %605 = vmatmul.mubr.f32.gmra.mxu0 %v538
        %v606 = vpop.f32.mrf.mxu0
        %v607 = vadd.f32 0.0, %v606
        %v608 = vpop.f32.mrf.mxu0
        %v609 = vadd.f32 0.0, %v608
        %610 = vdwg.mxu0
        %v611 = vmax.f32 %v607, 0.0
        %v612 = vmax.f32 %v609, 0.0
        %613 = vst [vmem:[%s251] sm:$0xff] %v611
        %614 = vst [vmem:[%s251 + $0x8] sm:$0xff] %v612
        %s615 = sand.u32 %s120, 1
        %s616 = scalar_lea.sflag [#allocation4], %s615
        %s617 = sand.u32 %s120, 1
        %s618 = smul.addr %s617, 16
        %s619 = scalar_lea.vmem [#allocation10], %s618
        // Predicated region
        $region53: #{tpu_custom_call.1} parent=35 // pred_check
          %p620 = pneg %p130
        $region54: #{tpu_custom_call.1} parent=35 // pred_check_branch
          %622 = sbr.rel (%p620) target = $region56
        $region55: #{tpu_custom_call.1} parent=35 // pred_region
          %s623 = smul.u32 2, %s23
          %s625 = ssub.s32 256, 256
          %626 = vsyncadd %s616, %s625
          %s627 = smul.addr %s623, 128
          %s628 = scalar_lea.hbm %s4, %s627
          %s630 = sshll.u32 %s619, 4
          %s631 = int_to_ptr.vmem [resolvable:$true] %s630
          %633 = dma.vmem_to_hbm [thread:$0]  %s631, 256, %s628, %s616
        $region56: #{tpu_custom_call.1} parent=35 // pred_fallthru
          _
      $region36: #{tpu_custom_call.1} parent=5 // pred_fallthru
        _
      %p634 = scmp.le.s32.totalorder 2, %s18
      // Predicated region
      $region57: #{tpu_custom_call.1} parent=5 // pred_check
        %p635 = pneg %p634
      $region58: #{tpu_custom_call.1} parent=5 // pred_check_branch
        %637 = sbr.rel (%p635) target = $region60
      $region59: #{tpu_custom_call.1} parent=5 // pred_region
        %s638 = ssub.s32 %s18, 2
        // Predicated region
        $region61: #{tpu_custom_call.1} parent=59 // pred_check
          %p639 = pneg %p136
        $region62: #{tpu_custom_call.1} parent=59 // pred_check_branch
          %641 = sbr.rel (%p639) target = $region64
        $region63: #{tpu_custom_call.1} parent=59 // pred_region
          %s642 = sand.u32 %s121, 1
          %s643 = scalar_lea.sflag [#allocation4], %s642
          %s644 = sand.u32 %s121, 1
          %s645 = smul.addr %s644, 16
          %s646 = scalar_lea.vmem [#allocation10], %s645
          %647 = dma.done %s643, 256
        $region64: #{tpu_custom_call.1} parent=59 // pred_fallthru
          _
      $region60: #{tpu_custom_call.1} parent=5 // pred_fallthru
        _
    $region6: #{tpu_custom_call.1} parent=1 // loop_footer
      %s22 = sadd.s32 1, %s18
    $region7: #{tpu_custom_call.1} parent=1 // loop_footer_branch
      %17 = sbr.rel target = $region3
    $region8: #{tpu_custom_call.1} parent=1 // loop_exit
      _
    %648 = vsyncpa [#allocation3], 1
    %s649 = scalar_lea.sflag [#allocation3], 1
    %650 = vsyncpa %s649, 1
    %651 = vsyncpa [#allocation6], 1
    %652 = vsyncpa [#allocation9], 1
    %653 = vsyncpa [#allocation4], 1
    %s654 = scalar_lea.sflag [#allocation4], 1
    %655 = vsyncpa %s654, 1

</llo_original>
